<compile_context>
chip_gen: v6e
topology: v6e:2x2x1
jax: 0.10.0
libtpu: 0.0.40
codegen_flags: <defaults>
</compile_context>

<pallas_src>
import math

import jax
import jax.numpy as jnp
from jax.experimental import pallas as pl
from jax.experimental.pallas import tpu as pltpu

LANE = 128  # hidden and action dims are zero-padded to a full 128-lane group


def _round_up(n, m):
    return ((n + m - 1) // m) * m


def _num_tensorcores():
    """2 TensorCores per chip on v7x, 1 on v4/v5e/v6e."""
    try:
        kind = jax.devices()[0].device_kind.lower()
    except Exception:
        return 1
    return 2 if "v7" in kind else 1


def _pick_batch_tile(batch, num_tc, cap=1024):
    """Per-grid-step overhead dominates per-tile work here, so use as few tiles
    as possible; on multi-TC chips keep >=2 tiles so the 'parallel' batch axis
    actually shards across TensorCores."""
    rows = _round_up(max(batch, 8), 8)
    if num_tc > 1 and batch > 8:
        rows = _round_up(-(-rows // num_tc), 8)
    return min(rows, cap)


def prepare_params(w1, b1, w2, b2):
    """Zero-pad hidden dim -> 128 and action dim -> 128 (exact: b1 pad is 0,
    ReLU(0)=0, padded w2 rows/cols are 0). Call once per CEM weight update and
    reuse across forward calls."""
    H = w1.shape[1]
    A = w2.shape[1]
    Hp = _round_up(H, LANE)
    Ap = _round_up(A, LANE)
    w1p = jnp.pad(w1, ((0, 0), (0, Hp - H)))
    b1p = jnp.pad(jnp.reshape(b1, (1, H)), ((0, 0), (0, Hp - H)))
    w2p = jnp.pad(w2, ((0, Hp - H), (0, Ap - A)))
    b2p = jnp.pad(jnp.reshape(b2, (1, A)), ((0, 0), (0, Ap - A)))
    return w1p, b1p, w2p, b2p


def mlp_kernel(x_ref, w1_ref, b1_ref, w2_ref, b2_ref, o_ref):
    # Hidden layer: [TM, S] @ [S, Hp] -> f32, bias + ReLU.
    h = jnp.dot(x_ref[...], w1_ref[...], preferred_element_type=jnp.float32)
    h = jnp.maximum(h + b1_ref[...], 0.0)
    # Output layer: [TM, Hp] @ [Hp, Ap] -> f32, bias (lane-dense Ap=128 output).
    out = jnp.dot(h, w2_ref[...], preferred_element_type=jnp.float32)
    o_ref[...] = out + b2_ref[...]


def cross_entropy_agent_forward(x, w1p, b1p, w2p, b2p, action_n, *, batch_tile=None):
    """Pallas forward pass of CrossEntropyAgent.network.

    x    : [B, state_dim] float32
    w1p  : [state_dim, Hp] float32 (hidden padded to 128), b1p : [1, Hp]
    w2p  : [Hp, Ap] float32 (action_n padded to 128),      b2p : [1, Ap]
    returns logits [B, action_n] float32
    """
    B, S = x.shape
    Hp = w1p.shape[1]
    Ap = w2p.shape[1]

    if batch_tile is None:
        TM = _pick_batch_tile(B, _num_tensorcores())
    else:
        TM = _round_up(min(batch_tile, _round_up(B, 8)), 8)

    grid = (pl.cdiv(B, TM),)  # ragged last tile handled/masked by Pallas

    cost = pl.CostEstimate(
        flops=2 * B * (S * Hp + Hp * Ap),
        transcendentals=0,
        bytes_accessed=4 * (B * S + B * Ap + S * Hp + Hp + Hp * Ap + Ap),
    )

    out = pl.pallas_call(
        mlp_kernel,
        out_shape=jax.ShapeDtypeStruct((B, Ap), jnp.float32),
        grid=grid,
        in_specs=[
            # Activations stream per batch tile (full last dim S; no S padding).
            pl.BlockSpec((TM, S), lambda i: (i, 0)),
            # Weights/biases: same block every step -> VMEM-resident (~80 KB).
            pl.BlockSpec((S, Hp), lambda i: (0, 0)),
            pl.BlockSpec((1, Hp), lambda i: (0, 0)),
            pl.BlockSpec((Hp, Ap), lambda i: (0, 0)),
            pl.BlockSpec((1, Ap), lambda i: (0, 0)),
        ],
        # Lane-dense (TM, 128) output block -> unmasked vector stores.
        out_specs=pl.BlockSpec((TM, Ap), lambda i: (i, 0)),
        compiler_params=pltpu.CompilerParams(
            dimension_semantics=("parallel",)  # batch tiles are independent
        ),
        cost_estimate=cost,
    )(x, w1p, b1p, w2p, b2p)

    return out[:, :action_n]


def init_params(key, state_dim, action_n, hidden=100):
    """PyTorch-style Linear init: U(-1/sqrt(fan_in), 1/sqrt(fan_in))."""
    k1, k2, k3, k4 = jax.random.split(key, 4)
    bound1 = 1.0 / math.sqrt(state_dim)
    bound2 = 1.0 / math.sqrt(hidden)
    w1 = jax.random.uniform(k1, (state_dim, hidden), jnp.float32, -bound1, bound1)
    b1 = jax.random.uniform(k2, (1, hidden), jnp.float32, -bound1, bound1)
    w2 = jax.random.uniform(k3, (hidden, action_n), jnp.float32, -bound2, bound2)
    b2 = jax.random.uniform(k4, (1, action_n), jnp.float32, -bound2, bound2)
    return w1, b1, w2, b2


def _reference(x, w1, b1, w2, b2):
    return jnp.maximum(x @ w1 + b1, 0.0) @ w2 + b2


# TODO(synk): get_action's softmax + np.random.choice sampling and
# update_policy's CrossEntropyLoss/Adam step are host-side / training logic,
# not part of the forward pass, so they are intentionally not kernelized.

if __name__ == "__main__":
    STATE_DIM, ACTION_N = 32, 4
    key = jax.random.PRNGKey(0)
    k_x, k_p, k_big = jax.random.split(key, 3)
    w1, b1, w2, b2 = init_params(k_p, STATE_DIM, ACTION_N)

    # Pad/cache weights once (as CEM would, per weight update).
    w1p, b1p, w2p, b2p = prepare_params(w1, b1, w2, b2)

    # Small shapes consistent with the module (single forward, B=8).
    B_small = 8
    x_small = jax.random.normal(k_x, (B_small, STATE_DIM), jnp.float32)
    logits_small = cross_entropy_agent_forward(x_small, w1p, b1p, w2p, b2p, ACTION_N)
    jax.block_until_ready(logits_small)
    ref_small = _reference(x_small, w1, b1, w2, b2)
    assert logits_small.shape == (B_small, ACTION_N)
    assert jnp.allclose(logits_small, ref_small, atol=1e-2, rtol=1e-2)

    # CEM-style batched evaluation: many states, non-multiple of the tile,
    # exercises the multi-step ragged grid path with resident weights.
    B_big = 1000
    x_big = jax.random.normal(k_big, (B_big, STATE_DIM), jnp.float32)
    logits_big = cross_entropy_agent_forward(
        x_big, w1p, b1p, w2p, b2p, ACTION_N, batch_tile=256)
    jax.block_until_ready(logits_big)
    ref_big = _reference(x_big, w1, b1, w2, b2)
    assert logits_big.shape == (B_big, ACTION_N)
    assert jnp.allclose(logits_big, ref_big, atol=1e-2, rtol=1e-2)

    print("KERNEL_OK")
</pallas_src>

<mosaic_0001>
module attributes {stable_mosaic.version = 11 : i64} {
  func.func @mlp_kernel(%arg0: i32, %arg1: memref<8x32xf32, #tpu.memory_space<vmem>>, %arg2: memref<32x128xf32, #tpu.memory_space<vmem>>, %arg3: memref<1x128xf32, #tpu.memory_space<vmem>>, %arg4: memref<128x128xf32, #tpu.memory_space<vmem>>, %arg5: memref<1x128xf32, #tpu.memory_space<vmem>>, %arg6: memref<8x128xf32, #tpu.memory_space<vmem>>) attributes {dimension_semantics = [#tpu.dimension_semantics<parallel>], iteration_bounds = array<i64: 1>, scalar_prefetch = 0 : i64, scratch_operands = 0 : i64, tpu.core_type = #tpu.core_type<tc>, window_params = [{transform_indices = @transform_0, window_bounds = array<i64: 8, 32>}, {pipeline_mode = #tpu.pipeline_mode<synchronous>, transform_indices = @transform_1, window_bounds = array<i64: 32, 128>}, {pipeline_mode = #tpu.pipeline_mode<synchronous>, transform_indices = @transform_2, window_bounds = array<i64: 1, 128>}, {pipeline_mode = #tpu.pipeline_mode<synchronous>, transform_indices = @transform_3, window_bounds = array<i64: 128, 128>}, {pipeline_mode = #tpu.pipeline_mode<synchronous>, transform_indices = @transform_4, window_bounds = array<i64: 1, 128>}, {transform_indices = @transform_5, window_bounds = array<i64: 8, 128>}]} {
    %c0 = arith.constant 0 : index
    %c0_0 = arith.constant 0 : index
    %0 = vector.load %arg1[%c0, %c0_0] : memref<8x32xf32, #tpu.memory_space<vmem>>, vector<8x32xf32>
    %c0_1 = arith.constant 0 : index
    %c0_2 = arith.constant 0 : index
    %1 = vector.load %arg2[%c0_1, %c0_2] : memref<32x128xf32, #tpu.memory_space<vmem>>, vector<32x128xf32>
    %cst = arith.constant dense<0.000000e+00> : vector<8x128xf32>
    %2 = tpu.matmul %0, %1, %cst {dimension_numbers = #tpu.dot_dimension_numbers<[1], [0], [0], [1], [0, 0, 1, 1], [], []>} : vector<8x32xf32>, vector<32x128xf32>, vector<8x128xf32> -> vector<8x128xf32>
    %c0_3 = arith.constant 0 : index
    %c0_4 = arith.constant 0 : index
    %3 = vector.load %arg3[%c0_3, %c0_4] : memref<1x128xf32, #tpu.memory_space<vmem>>, vector<1x128xf32>
    %4 = vector.broadcast %3 : vector<1x128xf32> to vector<8x128xf32>
    %5 = arith.addf %2, %4 : vector<8x128xf32>
    %cst_5 = arith.constant 0.000000e+00 : f32
    %6 = vector.broadcast %cst_5 : f32 to vector<8x128xf32>
    %7 = arith.maximumf %5, %6 : vector<8x128xf32>
    %c0_6 = arith.constant 0 : index
    %c0_7 = arith.constant 0 : index
    %8 = vector.load %arg4[%c0_6, %c0_7] : memref<128x128xf32, #tpu.memory_space<vmem>>, vector<128x128xf32>
    %cst_8 = arith.constant dense<0.000000e+00> : vector<8x128xf32>
    %9 = tpu.matmul %7, %8, %cst_8 {dimension_numbers = #tpu.dot_dimension_numbers<[1], [0], [0], [1], [0, 0, 1, 1], [], []>} : vector<8x128xf32>, vector<128x128xf32>, vector<8x128xf32> -> vector<8x128xf32>
    %c0_9 = arith.constant 0 : index
    %c0_10 = arith.constant 0 : index
    %10 = vector.load %arg5[%c0_9, %c0_10] : memref<1x128xf32, #tpu.memory_space<vmem>>, vector<1x128xf32>
    %11 = vector.broadcast %10 : vector<1x128xf32> to vector<8x128xf32>
    %12 = arith.addf %9, %11 : vector<8x128xf32>
    %c0_11 = arith.constant 0 : index
    %c0_12 = arith.constant 0 : index
    %13 = vector.load %arg6[%c0_11, %c0_12] : memref<8x128xf32, #tpu.memory_space<vmem>>, vector<8x128xf32>
    tpu.vector_store %arg6[%c0_11, %c0_12], %12 {strides = array<i32>} : memref<8x128xf32, #tpu.memory_space<vmem>>, vector<8x128xf32>,
    return
  }
  func.func @transform_0(%arg0: i32) -> (i32, i32) {
    %c0_i32 = arith.constant 0 : i32
    %c0_i32_0 = arith.constant 0 : i32
    return %arg0, %c0_i32 : i32, i32
  }
  func.func @transform_1(%arg0: i32) -> (i32, i32) {
    %c0_i32 = arith.constant 0 : i32
    %c0_i32_0 = arith.constant 0 : i32
    %c0_i32_1 = arith.constant 0 : i32
    return %c0_i32, %c0_i32_0 : i32, i32
  }
  func.func @transform_2(%arg0: i32) -> (i32, i32) {
    %c0_i32 = arith.constant 0 : i32
    %c0_i32_0 = arith.constant 0 : i32
    %c0_i32_1 = arith.constant 0 : i32
    return %c0_i32, %c0_i32_0 : i32, i32
  }
  func.func @transform_3(%arg0: i32) -> (i32, i32) {
    %c0_i32 = arith.constant 0 : i32
    %c0_i32_0 = arith.constant 0 : i32
    %c0_i32_1 = arith.constant 0 : i32
    return %c0_i32, %c0_i32_0 : i32, i32
  }
  func.func @transform_4(%arg0: i32) -> (i32, i32) {
    %c0_i32 = arith.constant 0 : i32
    %c0_i32_0 = arith.constant 0 : i32
    %c0_i32_1 = arith.constant 0 : i32
    return %c0_i32, %c0_i32_0 : i32, i32
  }
  func.func @transform_5(%arg0: i32) -> (i32, i32) {
    %c0_i32 = arith.constant 0 : i32
    %c0_i32_0 = arith.constant 0 : i32
    return %arg0, %c0_i32 : i32, i32
  }
}

</mosaic_0001>

<llo_original>
// kernel: tpu_custom_call.1
$region0: #{tpu_custom_call.1}
  #allocation0 [shape = 'u32[]', space=smem, size = 0x4, offset = 0x4, fixed_abs, tag = 'smem constant byte address 0x4 - core index']
  #allocation1 [shape = 'u32[144,128]{1,0:T(1,128)}', space=vmem, size = 0x12000, scoped, tag = 'internal scratch']
  %s0 = inlined_call_operand.hbm [shape: f32[8,32], index: 0, kind: input, shape index: {}]
  %s1 = inlined_call_operand.hbm [shape: f32[32,128], index: 1, kind: input, shape index: {}]
  %s2 = inlined_call_operand.vmem [shape: f32[1,128], index: 2, kind: input, shape index: {}]
  %s3 = inlined_call_operand.hbm [shape: f32[128,128], index: 3, kind: input, shape index: {}]
  %s4 = inlined_call_operand.vmem [shape: f32[1,128], index: 4, kind: input, shape index: {}]
  %s5 = inlined_call_operand.hbm [shape: f32[8,128], index: 5, kind: output, shape index: {}]
  %s6 = sld [smem:[#allocation0]]
  $region42: #{tpu_custom_call.1} parent=0
    _
  %s8 = ssub.s32 1, %s6
  %s9 = scalar_select 0, %s8, %s6
  $region1: #{tpu_custom_call.1} parent=0
    #allocation2 [shape = 'u8[4096]{0}', space=vmem, size = 0x1000, scoped, tag = 'input window, operand 0, single buffered']
    #allocation3 [shape = 's32[1]{0}', space=sflag, size = 0x4, scoped, tag = 'scoped memory for tpu_custom_call.1']
    #allocation4 [shape = 's32[1]{0}', space=sflag, size = 0x4, scoped, tag = 'scoped memory for tpu_custom_call.1']
    #allocation5 [shape = 'u8[16384]{0}', space=vmem, size = 0x4000, scoped, tag = 'input window, operand 1, single buffered']
    #allocation6 [shape = 's32[1]{0}', space=sflag, size = 0x4, scoped, tag = 'scoped memory for tpu_custom_call.1']
    #allocation7 [shape = 'u8[65536]{0}', space=vmem, size = 0x10000, scoped, tag = 'input window, operand 3, single buffered']
    #allocation8 [shape = 'u8[4096]{0}', space=vmem, size = 0x1000, scoped, tag = 'output window, operand 0, single buffered']
    %10 = vsyncpa [#allocation3], 0
    %11 = vsyncpa [#allocation6], 0
    %12 = vsyncpa [#allocation4], 0
    // Predicated region
    $region2: #{tpu_custom_call.1} parent=1 // pred_check
      _
    $region3: #{tpu_custom_call.1} parent=1 // pred_check_branch
      %14 = sbr.rel (0) target = $region5
    $region4: #{tpu_custom_call.1} parent=1 // pred_region
      %s16 = ssub.s32 128, 128
      %17 = vsyncadd [#allocation3], %s16
      %s19 = sshll.u32 [#allocation2], 4
      %s20 = int_to_ptr.vmem [resolvable:$true] %s19
      %22 = dma.hbm_to_vmem [thread:$0]  %s0, 128, %s20, [#allocation3]
    $region5: #{tpu_custom_call.1} parent=1 // pred_fallthru
      _
    // Predicated region
    $region6: #{tpu_custom_call.1} parent=1 // pred_check
      _
    $region7: #{tpu_custom_call.1} parent=1 // pred_check_branch
      %24 = sbr.rel (0) target = $region9
    $region8: #{tpu_custom_call.1} parent=1 // pred_region
      %s26 = ssub.s32 512, 512
      %27 = vsyncadd [#allocation6], %s26
      %s28 = sshll.u32 [#allocation5], 4
      %s29 = int_to_ptr.vmem [resolvable:$true] %s28
      %34 = dma.hbm_to_vmem [thread:$0]  %s1, 512, %s29, [#allocation6], 128, 128, 8
    $region9: #{tpu_custom_call.1} parent=1 // pred_fallthru
      _
    // Predicated region
    $region10: #{tpu_custom_call.1} parent=1 // pred_check
      _
    $region11: #{tpu_custom_call.1} parent=1 // pred_check_branch
      %36 = sbr.rel (0) target = $region13
    $region12: #{tpu_custom_call.1} parent=1 // pred_region
      _
    $region13: #{tpu_custom_call.1} parent=1 // pred_fallthru
      _
    // Predicated region
    $region14: #{tpu_custom_call.1} parent=1 // pred_check
      _
    $region15: #{tpu_custom_call.1} parent=1 // pred_check_branch
      %38 = sbr.rel (0) target = $region17
    $region16: #{tpu_custom_call.1} parent=1 // pred_region
      %s40 = ssub.s32 2048, 2048
      %41 = vsyncadd [#allocation6], %s40
      %s42 = sshll.u32 [#allocation7], 4
      %s43 = int_to_ptr.vmem [resolvable:$true] %s42
      %48 = dma.hbm_to_vmem [thread:$0]  %s3, 2048, %s43, [#allocation6], 128, 128, 8
    $region17: #{tpu_custom_call.1} parent=1 // pred_fallthru
      _
    // Predicated region
    $region18: #{tpu_custom_call.1} parent=1 // pred_check
      _
    $region19: #{tpu_custom_call.1} parent=1 // pred_check_branch
      %50 = sbr.rel (0) target = $region21
    $region20: #{tpu_custom_call.1} parent=1 // pred_region
      _
    $region21: #{tpu_custom_call.1} parent=1 // pred_fallthru
      _
    // Predicated region
    $region22: #{tpu_custom_call.1} parent=1 // pred_check
      _
    $region23: #{tpu_custom_call.1} parent=1 // pred_check_branch
      %52 = sbr.rel (0) target = $region25
    $region24: #{tpu_custom_call.1} parent=1 // pred_region
      %53 = dma.done [#allocation3], 128
    $region25: #{tpu_custom_call.1} parent=1 // pred_fallthru
      _
    // Predicated region
    $region26: #{tpu_custom_call.1} parent=1 // pred_check
      _
    $region27: #{tpu_custom_call.1} parent=1 // pred_check_branch
      %55 = sbr.rel (0) target = $region29
    $region28: #{tpu_custom_call.1} parent=1 // pred_region
      %56 = dma.done [#allocation6], 512
    $region29: #{tpu_custom_call.1} parent=1 // pred_fallthru
      _
    // Predicated region
    $region30: #{tpu_custom_call.1} parent=1 // pred_check
      _
    $region31: #{tpu_custom_call.1} parent=1 // pred_check_branch
      %58 = sbr.rel (0) target = $region33
    $region32: #{tpu_custom_call.1} parent=1 // pred_region
      %59 = dma.done [#allocation6], 2048
    $region33: #{tpu_custom_call.1} parent=1 // pred_fallthru
      _
    %v60 = vld [vmem:[#allocation2] sm:$0xff]
    %v61 = vld [vmem:[#allocation5] sm:$0xff]
    %v62 = vld [vmem:[#allocation5 + $0x8] sm:$0xff]
    %v63 = vld [vmem:[#allocation5 + $0x10] sm:$0xff]
    %v64 = vld [vmem:[#allocation5 + $0x18] sm:$0xff]
    %v65 = vld [vmem:[%s2] sm:$0x1]
    %v67 = vlaneseq
    %v68 = vshrl.u32 %v67, 7
    %v69 = vsub.s32 0, %v68
    %v70 = vrot.slane %v65, %v69
    %vm72 = vcmask 261120
    %v74 = vsel %vm72, %v60, 0
    %76 = vmatprep.subr.mxu0 0.0
    %77 = vmatpush1.msra.mxu0 0.0
    %78 = vmatprep.subr.mxu0 0.0
    %79 = vmatpush1.msra.mxu0 0.0
    %80 = vmatprep.subr.mxu0 0.0
    %81 = vmatpush1.msra.mxu0 0.0
    %82 = vmatprep.subr.mxu0 0.0
    %83 = vmatpush1.msra.mxu0 0.0
    %84 = vmatprep.subr.mxu0 0.0
    %85 = vmatpush1.msra.mxu0 0.0
    %86 = vmatprep.subr.mxu0 0.0
    %87 = vmatpush1.msra.mxu0 0.0
    %88 = vmatprep.subr.mxu0 0.0
    %89 = vmatpush1.msra.mxu0 0.0
    %90 = vmatprep.subr.mxu0 0.0
    %91 = vmatpush1.msra.mxu0 0.0
    %92 = vmatprep.subr.mxu0 0.0
    %93 = vmatpush1.msra.mxu0 0.0
    %94 = vmatprep.subr.mxu0 0.0
    %95 = vmatpush1.msra.mxu0 0.0
    %96 = vmatprep.subr.mxu0 0.0
    %97 = vmatpush1.msra.mxu0 0.0
    %98 = vmatprep.subr.mxu0 0.0
    %99 = vmatpush1.msra.mxu0 0.0
    %100 = vmatprep.subr.mxu0 0.0
    %101 = vmatpush1.msra.mxu0 %v64
    %102 = vmatprep.subr.mxu0 0.0
    %103 = vmatpush1.msra.mxu0 %v63
    %104 = vmatprep.subr.mxu0 0.0
    %105 = vmatpush1.msra.mxu0 %v62
    %106 = vmatprep.subr.mxu0 0.0
    %107 = vmatpush1.msra.mxu0 %v61
    %108 = vmatprep.subr.mxu0 0.0
    %109 = vmatpush2.msra.mxu0 0.0
    %110 = vmatprep.subr.mxu0 0.0
    %111 = vmatpush2.msra.mxu0 0.0
    %112 = vmatprep.subr.mxu0 0.0
    %113 = vmatpush2.msra.mxu0 0.0
    %114 = vmatprep.subr.mxu0 0.0
    %115 = vmatpush2.msra.mxu0 0.0
    %116 = vmatprep.subr.mxu0 0.0
    %117 = vmatpush2.msra.mxu0 0.0
    %118 = vmatprep.subr.mxu0 0.0
    %119 = vmatpush2.msra.mxu0 0.0
    %120 = vmatprep.subr.mxu0 0.0
    %121 = vmatpush2.msra.mxu0 0.0
    %122 = vmatprep.subr.mxu0 0.0
    %123 = vmatpush2.msra.mxu0 0.0
    %124 = vmatprep.subr.mxu0 0.0
    %125 = vmatpush2.msra.mxu0 0.0
    %126 = vmatprep.subr.mxu0 0.0
    %127 = vmatpush2.msra.mxu0 0.0
    %128 = vmatprep.subr.mxu0 0.0
    %129 = vmatpush2.msra.mxu0 0.0
    %130 = vmatprep.subr.mxu0 0.0
    %131 = vmatpush2.msra.mxu0 0.0
    %132 = vmatprep.subr.mxu0 0.0
    %133 = vmatpush2.msra.mxu0 0.0
    %134 = vmatprep.subr.mxu0 0.0
    %135 = vmatpush2.msra.mxu0 0.0
    %136 = vmatprep.subr.mxu0 0.0
    %137 = vmatpush2.msra.mxu0 0.0
    %138 = vmatprep.subr.mxu0 0.0
    %139 = vmatpush2.msra.mxu0 0.0
    %140 = vmatprep.mubr.f32.mxu0 0.0
    %141 = vmatmul.mubr.f32.gmra.mxu0 %v74
    %v142 = vpop.f32.mrf.mxu0
    %v143 = vadd.f32 %v70, %v142
    %v144 = vpop.f32.mrf.mxu0
    %145 = vdwg.mxu0
    %v146 = vmax.f32 %v143, 0.0
    %v147 = vld [vmem:[#allocation7] sm:$0xff]
    %v148 = vld [vmem:[#allocation7 + $0x8] sm:$0xff]
    %v149 = vld [vmem:[#allocation7 + $0x10] sm:$0xff]
    %v150 = vld [vmem:[#allocation7 + $0x18] sm:$0xff]
    %v151 = vld [vmem:[#allocation7 + $0x20] sm:$0xff]
    %v152 = vld [vmem:[#allocation7 + $0x28] sm:$0xff]
    %v153 = vld [vmem:[#allocation7 + $0x30] sm:$0xff]
    %v154 = vld [vmem:[#allocation7 + $0x38] sm:$0xff]
    %v155 = vld [vmem:[#allocation7 + $0x40] sm:$0xff]
    %v156 = vld [vmem:[#allocation7 + $0x48] sm:$0xff]
    %v157 = vld [vmem:[#allocation7 + $0x50] sm:$0xff]
    %v158 = vld [vmem:[#allocation7 + $0x58] sm:$0xff]
    %v159 = vld [vmem:[#allocation7 + $0x60] sm:$0xff]
    %v160 = vld [vmem:[#allocation7 + $0x68] sm:$0xff]
    %v161 = vld [vmem:[#allocation7 + $0x70] sm:$0xff]
    %v162 = vld [vmem:[#allocation7 + $0x78] sm:$0xff]
    %v163 = vld [vmem:[%s4] sm:$0x1]
    %v165 = vlaneseq
    %v166 = vshrl.u32 %v165, 7
    %v167 = vsub.s32 0, %v166
    %v168 = vrot.slane %v163, %v167
    %170 = vmatprep.subr.mxu0 0.0
    %171 = vmatpush1.msra.mxu0 %v162
    %172 = vmatprep.subr.mxu0 0.0
    %173 = vmatpush1.msra.mxu0 %v161
    %174 = vmatprep.subr.mxu0 0.0
    %175 = vmatpush1.msra.mxu0 %v160
    %176 = vmatprep.subr.mxu0 0.0
    %177 = vmatpush1.msra.mxu0 %v159
    %178 = vmatprep.subr.mxu0 0.0
    %179 = vmatpush1.msra.mxu0 %v158
    %180 = vmatprep.subr.mxu0 0.0
    %181 = vmatpush1.msra.mxu0 %v157
    %182 = vmatprep.subr.mxu0 0.0
    %183 = vmatpush1.msra.mxu0 %v156
    %184 = vmatprep.subr.mxu0 0.0
    %185 = vmatpush1.msra.mxu0 %v155
    %186 = vmatprep.subr.mxu0 0.0
    %187 = vmatpush1.msra.mxu0 %v154
    %188 = vmatprep.subr.mxu0 0.0
    %189 = vmatpush1.msra.mxu0 %v153
    %190 = vmatprep.subr.mxu0 0.0
    %191 = vmatpush1.msra.mxu0 %v152
    %192 = vmatprep.subr.mxu0 0.0
    %193 = vmatpush1.msra.mxu0 %v151
    %194 = vmatprep.subr.mxu0 0.0
    %195 = vmatpush1.msra.mxu0 %v150
    %196 = vmatprep.subr.mxu0 0.0
    %197 = vmatpush1.msra.mxu0 %v149
    %198 = vmatprep.subr.mxu0 0.0
    %199 = vmatpush1.msra.mxu0 %v148
    %200 = vmatprep.subr.mxu0 0.0
    %201 = vmatpush1.msra.mxu0 %v147
    %202 = vmatprep.subr.mxu0 0.0
    %203 = vmatpush2.msra.mxu0 0.0
    %204 = vmatprep.subr.mxu0 0.0
    %205 = vmatpush2.msra.mxu0 0.0
    %206 = vmatprep.subr.mxu0 0.0
    %207 = vmatpush2.msra.mxu0 0.0
    %208 = vmatprep.subr.mxu0 0.0
    %209 = vmatpush2.msra.mxu0 0.0
    %210 = vmatprep.subr.mxu0 0.0
    %211 = vmatpush2.msra.mxu0 0.0
    %212 = vmatprep.subr.mxu0 0.0
    %213 = vmatpush2.msra.mxu0 0.0
    %214 = vmatprep.subr.mxu0 0.0
    %215 = vmatpush2.msra.mxu0 0.0
    %216 = vmatprep.subr.mxu0 0.0
    %217 = vmatpush2.msra.mxu0 0.0
    %218 = vmatprep.subr.mxu0 0.0
    %219 = vmatpush2.msra.mxu0 0.0
    %220 = vmatprep.subr.mxu0 0.0
    %221 = vmatpush2.msra.mxu0 0.0
    %222 = vmatprep.subr.mxu0 0.0
    %223 = vmatpush2.msra.mxu0 0.0
    %224 = vmatprep.subr.mxu0 0.0
    %225 = vmatpush2.msra.mxu0 0.0
    %226 = vmatprep.subr.mxu0 0.0
    %227 = vmatpush2.msra.mxu0 0.0
    %228 = vmatprep.subr.mxu0 0.0
    %229 = vmatpush2.msra.mxu0 0.0
    %230 = vmatprep.subr.mxu0 0.0
    %231 = vmatpush2.msra.mxu0 0.0
    %232 = vmatprep.subr.mxu0 0.0
    %233 = vmatpush2.msra.mxu0 0.0
    %234 = vmatprep.mubr.f32.mxu0 0.0
    %235 = vmatmul.mubr.f32.gmra.mxu0 %v146
    %v236 = vpop.f32.mrf.mxu0
    %v237 = vadd.f32 %v168, %v236
    %v238 = vpop.f32.mrf.mxu0
    %239 = vdwg.mxu0
    %240 = vst [vmem:[#allocation8] sm:$0xff] %v237
    // Predicated region
    $region34: #{tpu_custom_call.1} parent=1 // pred_check
      _
    $region35: #{tpu_custom_call.1} parent=1 // pred_check_branch
      %242 = sbr.rel (0) target = $region37
    $region36: #{tpu_custom_call.1} parent=1 // pred_region
      %s244 = ssub.s32 128, 128
      %245 = vsyncadd [#allocation4], %s244
      %s247 = sshll.u32 [#allocation8], 4
      %s248 = int_to_ptr.vmem [resolvable:$true] %s247
      %250 = dma.vmem_to_hbm [thread:$0]  %s248, 128, %s5, [#allocation4]
    $region37: #{tpu_custom_call.1} parent=1 // pred_fallthru
      _
    // Predicated region
    $region38: #{tpu_custom_call.1} parent=1 // pred_check
      _
    $region39: #{tpu_custom_call.1} parent=1 // pred_check_branch
      %252 = sbr.rel (0) target = $region41
    $region40: #{tpu_custom_call.1} parent=1 // pred_region
      %253 = dma.done [#allocation4], 128
    $region41: #{tpu_custom_call.1} parent=1 // pred_fallthru
      _
    %254 = vsyncpa [#allocation3], 1
    %255 = vsyncpa [#allocation6], 1
    %256 = vsyncpa [#allocation4], 1

</llo_original>
